<compile_context>
chip_gen: v7x
topology: tpu7x:2x2x1
jax: 0.10.0
libtpu: 0.0.40
codegen_flags: <defaults>
</compile_context>

<pallas_src>
import jax
import jax.numpy as jnp
from jax import lax
from jax.experimental import pallas as pl
from jax.experimental.pallas import tpu as pltpu

# ----------------------------- synthetic config ------------------------------
INPUT_CHANNELS = 4       # config.input_channels
FILTERS = 32             # config.filters
BOARD_H = 8
BOARD_W = 8
BN_EPS = 1e-5


# ------------------------------ Pallas kernel --------------------------------
def _convblock_kernel(x_ref, w_ref, shift_ref, o_ref):
    """Fused 3x3 conv + folded (bias+BN) + ReLU for a tile of batch elements.

    x_ref:     (B_TILE, H+2, (W+2)*C)  spatially padded NHWC activations
    w_ref:     (3*(W+2)*C, W*F)        banded per-row weights (BN scale folded)
    shift_ref: (1, W*F)                folded conv-bias + BN shift
    o_ref:     (B_TILE, H, W*F)        lane-dense output (NHWC, (W,F) flattened)
    """
    bt, h, wf = o_ref.shape
    kc = x_ref.shape[2]                       # (W+2)*C

    # Output row h needs padded input rows h, h+1, h+2. Concatenate the three
    # row-shifted views along the contraction dim so the whole 3x3 conv is a
    # single MXU matmul with K = 3*(W+2)*C.
    lhs = jnp.concatenate(
        [x_ref[:, kh:kh + h, :] for kh in range(3)], axis=-1)   # (B_TILE,H,3*kc)
    lhs = lhs.reshape(bt * h, 3 * kc)

    acc = jnp.dot(lhs, w_ref[...], preferred_element_type=jnp.float32)
    # Folded bias + BatchNorm shift, then ReLU; lane-dense (M, W*F) store.
    out = jnp.maximum(acc + shift_ref[...], 0.0)
    o_ref[...] = out.reshape(bt, h, wf)


# ------------------------------ parameter folding -----------------------------
def fold_convblock_params(w_fchw, bias, gamma, beta, mean, var, board_w):
    """Fold conv bias + BN (running stats) into a banded weight and a shift.

    Returns:
      w_band: (3*(W+2)*C, W*F) f32, row index = kh*(W+2)*C + iw*C + c.
      shift:  (1, W*F) f32.
    Run ONCE at parameter-prep time (outside the per-forward jit).
    """
    f, c, _, _ = w_fchw.shape
    wp = board_w + 2
    scale = gamma / jnp.sqrt(var + BN_EPS)                       # (F,)
    shift = bias * scale + beta - mean * scale                   # (F,)

    # (F, C, 3, 3) -> (kh, kw, C, F), BN scale folded in.
    w_taps = jnp.transpose(w_fchw, (2, 3, 1, 0)) * scale         # (3, 3, C, F)

    # Banded matrix: column (w, f) takes tap (kh, iw - w, c) from padded input
    # column iw when 0 <= iw - w <= 2, else zero.
    iw = jnp.arange(wp)[:, None]                                 # padded input col
    ow = jnp.arange(board_w)[None, :]                            # output col
    kw = iw - ow                                                 # (W+2, W)
    valid = ((kw >= 0) & (kw <= 2)).astype(w_taps.dtype)
    band = w_taps[:, jnp.clip(kw, 0, 2), :, :]                   # (3, W+2, W, C, F)
    band = band * valid[None, :, :, None, None]
    band = jnp.transpose(band, (0, 1, 3, 2, 4))                  # (3, W+2, C, W, F)
    w_band = band.reshape(3 * wp * c, board_w * f)

    shift_tiled = jnp.tile(shift, (board_w,)).reshape(1, board_w * f)
    return w_band, shift_tiled


# ------------------------------ forward wrapper --------------------------------
@jax.jit
def convblock_forward(x_nchw, w_band, shift_tiled):
    n, c, h, w = x_nchw.shape
    f = shift_tiled.shape[1] // w
    kc = (w + 2) * c

    # Batch tile: target M = B_TILE*H ~= 128 MXU rows; multiple grid steps feed
    # both v7x TensorCores at realistic batch sizes.
    b_tile = max(1, min(n, 128 // h))
    n_pad = -(-n // b_tile) * b_tile

    # NCHW -> padded NHWC with the padded width folded into lanes.
    x_nhwc = jnp.transpose(x_nchw, (0, 2, 3, 1))                 # (N, H, W, C)
    xpad = jnp.pad(x_nhwc, ((0, n_pad - n), (1, 1), (1, 1), (0, 0)))
    xs = xpad.reshape(n_pad, h + 2, kc)                          # (Np, H+2, (W+2)*C)

    out = pl.pallas_call(
        _convblock_kernel,
        grid=(n_pad // b_tile,),
        in_specs=[
            pl.BlockSpec((b_tile, h + 2, kc), lambda b: (b, 0, 0)),
            pl.BlockSpec((3 * kc, w * f), lambda b: (0, 0)),     # grid-invariant
            pl.BlockSpec((1, w * f), lambda b: (0, 0)),          # grid-invariant
        ],
        out_specs=pl.BlockSpec((b_tile, h, w * f), lambda b: (b, 0, 0)),
        out_shape=jax.ShapeDtypeStruct((n_pad, h, w * f), jnp.float32),
        compiler_params=pltpu.CompilerParams(
            dimension_semantics=("parallel",)),
    )(xs, w_band, shift_tiled)

    # Lane-dense (N, H, W*F) NHWC -> NCHW to match the PyTorch module's output.
    # TODO(synk): downstream consumers that accept NHWC should skip this
    # transpose (it is an extra full-output HBM read+write outside the kernel).
    return jnp.transpose(out[:n].reshape(n, h, w, f), (0, 3, 1, 2))


# ------------------------------ pure-JAX reference ----------------------------
def convblock_reference(x_nchw, w_fchw, bias, gamma, beta, mean, var):
    y = lax.conv_general_dilated(
        x_nchw, w_fchw, window_strides=(1, 1), padding=((1, 1), (1, 1)),
        dimension_numbers=("NCHW", "OIHW", "NCHW"))
    y = y + bias[None, :, None, None]
    scale = gamma / jnp.sqrt(var + BN_EPS)
    shift = beta - mean * scale
    y = y * scale[None, :, None, None] + shift[None, :, None, None]
    return jnp.maximum(y, 0.0)


# ----------------------------------- main --------------------------------------
if __name__ == "__main__":
    key = jax.random.PRNGKey(0)
    k_x, k_w, k_b, k_g, k_be, k_m, k_v = jax.random.split(key, 7)

    x = jax.random.normal(k_x, (2, INPUT_CHANNELS, BOARD_H, BOARD_W),
                          dtype=jnp.float32)
    w = 0.1 * jax.random.normal(k_w, (FILTERS, INPUT_CHANNELS, 3, 3),
                                dtype=jnp.float32)
    b = 0.1 * jax.random.normal(k_b, (FILTERS,), dtype=jnp.float32)
    gamma = 1.0 + 0.1 * jax.random.normal(k_g, (FILTERS,), dtype=jnp.float32)
    beta = 0.1 * jax.random.normal(k_be, (FILTERS,), dtype=jnp.float32)
    mean = 0.1 * jax.random.normal(k_m, (FILTERS,), dtype=jnp.float32)
    var = 1.0 + 0.5 * jax.random.uniform(k_v, (FILTERS,), dtype=jnp.float32)

    # One-time parameter folding, hoisted out of the steady-state forward path.
    w_band, shift_tiled = fold_convblock_params(w, b, gamma, beta, mean, var,
                                                BOARD_W)
    w_band = jax.block_until_ready(w_band)

    out = convblock_forward(x, w_band, shift_tiled)
    out = jax.block_until_ready(out)

    assert out.shape == (2, FILTERS, BOARD_H, BOARD_W)
    ref = convblock_reference(x, w, b, gamma, beta, mean, var)
    max_err = float(jnp.max(jnp.abs(out - ref)))
    assert jnp.allclose(out, ref, atol=1e-4, rtol=1e-4), max_err
    assert bool(jnp.all(out >= 0.0))   # ReLU output

    print("KERNEL_OK")
</pallas_src>

<mosaic_0001>
module attributes {stable_mosaic.version = 11 : i64} {
  func.func @_convblock_kernel(%arg0: i32, %arg1: memref<2x10x40xf32, #tpu.memory_space<vmem>>, %arg2: memref<120x256xf32, #tpu.memory_space<vmem>>, %arg3: memref<1x256xf32, #tpu.memory_space<vmem>>, %arg4: memref<2x8x256xf32, #tpu.memory_space<vmem>>) attributes {dimension_semantics = [#tpu.dimension_semantics<parallel>], iteration_bounds = array<i64: 1>, scalar_prefetch = 0 : i64, scratch_operands = 0 : i64, tpu.core_type = #tpu.core_type<tc>, window_params = [{transform_indices = @transform_0, window_bounds = array<i64: 2, 10, 40>}, {pipeline_mode = #tpu.pipeline_mode<synchronous>, transform_indices = @transform_1, window_bounds = array<i64: 120, 256>}, {pipeline_mode = #tpu.pipeline_mode<synchronous>, transform_indices = @transform_2, window_bounds = array<i64: 1, 256>}, {transform_indices = @transform_3, window_bounds = array<i64: 2, 8, 256>}]} {
    %c0 = arith.constant 0 : index
    %c0_0 = arith.constant 0 : index
    %c0_1 = arith.constant 0 : index
    %0 = vector.load %arg1[%c0, %c0_0, %c0_1] : memref<2x10x40xf32, #tpu.memory_space<vmem>>, vector<2x8x40xf32>
    %c0_2 = arith.constant 0 : index
    %c1 = arith.constant 1 : index
    %c0_3 = arith.constant 0 : index
    %1 = vector.load %arg1[%c0_2, %c1, %c0_3] : memref<2x10x40xf32, #tpu.memory_space<vmem>>, vector<2x8x40xf32>
    %c0_4 = arith.constant 0 : index
    %c2 = arith.constant 2 : index
    %c0_5 = arith.constant 0 : index
    %2 = vector.load %arg1[%c0_4, %c2, %c0_5] : memref<2x10x40xf32, #tpu.memory_space<vmem>>, vector<2x8x40xf32>
    %3 = tpu.concatenate %0, %1, %2 in 2 : vector<2x8x40xf32>, vector<2x8x40xf32>, vector<2x8x40xf32> -> vector<2x8x120xf32>
    %4 = vector.shape_cast %3 : vector<2x8x120xf32> to vector<16x120xf32>
    %c0_6 = arith.constant 0 : index
    %c0_7 = arith.constant 0 : index
    %5 = vector.load %arg2[%c0_6, %c0_7] : memref<120x256xf32, #tpu.memory_space<vmem>>, vector<120x256xf32>
    %cst = arith.constant dense<0.000000e+00> : vector<16x256xf32>
    %6 = tpu.matmul %4, %5, %cst {dimension_numbers = #tpu.dot_dimension_numbers<[1], [0], [0], [1], [0, 0, 1, 1], [], []>} : vector<16x120xf32>, vector<120x256xf32>, vector<16x256xf32> -> vector<16x256xf32>
    %c0_8 = arith.constant 0 : index
    %c0_9 = arith.constant 0 : index
    %7 = vector.load %arg3[%c0_8, %c0_9] : memref<1x256xf32, #tpu.memory_space<vmem>>, vector<1x256xf32>
    %8 = vector.broadcast %7 : vector<1x256xf32> to vector<16x256xf32>
    %9 = arith.addf %6, %8 : vector<16x256xf32>
    %cst_10 = arith.constant 0.000000e+00 : f32
    %10 = vector.broadcast %cst_10 : f32 to vector<16x256xf32>
    %11 = arith.maximumf %9, %10 : vector<16x256xf32>
    %12 = vector.shape_cast %11 : vector<16x256xf32> to vector<2x8x256xf32>
    %c0_11 = arith.constant 0 : index
    %c0_12 = arith.constant 0 : index
    %c0_13 = arith.constant 0 : index
    %13 = vector.load %arg4[%c0_11, %c0_12, %c0_13] : memref<2x8x256xf32, #tpu.memory_space<vmem>>, vector<2x8x256xf32>
    tpu.vector_store %arg4[%c0_11, %c0_12, %c0_13], %12 {strides = array<i32>} : memref<2x8x256xf32, #tpu.memory_space<vmem>>, vector<2x8x256xf32>,
    return
  }
  func.func @transform_0(%arg0: i32) -> (i32, i32, i32) {
    %c0_i32 = arith.constant 0 : i32
    %c0_i32_0 = arith.constant 0 : i32
    %c0_i32_1 = arith.constant 0 : i32
    return %arg0, %c0_i32, %c0_i32_0 : i32, i32, i32
  }
  func.func @transform_1(%arg0: i32) -> (i32, i32) {
    %c0_i32 = arith.constant 0 : i32
    %c0_i32_0 = arith.constant 0 : i32
    %c0_i32_1 = arith.constant 0 : i32
    return %c0_i32, %c0_i32_0 : i32, i32
  }
  func.func @transform_2(%arg0: i32) -> (i32, i32) {
    %c0_i32 = arith.constant 0 : i32
    %c0_i32_0 = arith.constant 0 : i32
    %c0_i32_1 = arith.constant 0 : i32
    return %c0_i32, %c0_i32_0 : i32, i32
  }
  func.func @transform_3(%arg0: i32) -> (i32, i32, i32) {
    %c0_i32 = arith.constant 0 : i32
    %c0_i32_0 = arith.constant 0 : i32
    %c0_i32_1 = arith.constant 0 : i32
    return %arg0, %c0_i32, %c0_i32_0 : i32, i32, i32
  }
}

</mosaic_0001>

<llo_original>
// kernel: convblock_forward.1
$region0: #{convblock_forward.1}
  #allocation0 [shape = 'u32[]', space=smem, size = 0x4, offset = 0x4, fixed_abs, tag = 'smem constant byte address 0x4 - core index']
  #allocation1 [shape = 'u32[144,128]{1,0:T(1,128)}', space=vmem, size = 0x12000, scoped, tag = 'internal scratch']
  %s0 = inlined_call_operand.vmem [shape: f32[2,10,40], index: 0, kind: input, shape index: {}]
  %s1 = inlined_call_operand.vmem [shape: f32[120,256], index: 1, kind: input, shape index: {}]
  %s2 = inlined_call_operand.vmem [shape: f32[1,256], index: 2, kind: input, shape index: {}]
  %s3 = inlined_call_operand.vmem [shape: f32[2,8,256], index: 3, kind: output, shape index: {}]
  %s4 = sld [smem:[#allocation0]]
  $region22: #{convblock_forward.1} parent=0
    _
  %s6 = ssub.s32 1, %s4
  %s7 = scalar_select 0, %s6, %s4
  // Predicated region
  $region2: #{convblock_forward.1} parent=0 // pred_check
    _
  $region3: #{convblock_forward.1} parent=0 // pred_check_branch
    %9 = sbr.rel (0) target = $region5
  $region4: #{convblock_forward.1} parent=0 // pred_region
    _
  $region5: #{convblock_forward.1} parent=0 // pred_fallthru
    _
  // Predicated region
  $region6: #{convblock_forward.1} parent=0 // pred_check
    _
  $region7: #{convblock_forward.1} parent=0 // pred_check_branch
    %11 = sbr.rel (0) target = $region9
  $region8: #{convblock_forward.1} parent=0 // pred_region
    _
  $region9: #{convblock_forward.1} parent=0 // pred_fallthru
    _
  // Predicated region
  $region10: #{convblock_forward.1} parent=0 // pred_check
    _
  $region11: #{convblock_forward.1} parent=0 // pred_check_branch
    %13 = sbr.rel (0) target = $region13
  $region12: #{convblock_forward.1} parent=0 // pred_region
    _
  $region13: #{convblock_forward.1} parent=0 // pred_fallthru
    _
  %v14 = vld [vmem:[%s0] sm:$0xff]
  %v15 = vld [vmem:[%s0 + $0x10] sm:$0xff]
  %v16 = vld [vmem:[%s0 + $0x1] sm:$0xff]
  %v17 = vld [vmem:[%s0 + $0x11] sm:$0xff]
  %v18 = vld [vmem:[%s0 + $0x2] sm:$0xff]
  %v19 = vld [vmem:[%s0 + $0x12] sm:$0xff]
  %22 = vrot.lane.b32.xlu0 %v16, 40
  %v23 = vpop.permute.xlu0 %22
  %24 = vrot.lane.b32.xlu0 %v17, 40
  %v25 = vpop.permute.xlu0 %24
  %30 = vrot.lane.b32.xlu0 %v18, 80
  %v31 = vpop.permute.xlu0 %30
  %32 = vrot.lane.b32.xlu0 %v19, 80
  %v33 = vpop.permute.xlu0 %32
  %vm36 = vcmask 326656
  %v37 = vsel %vm36, %v14, %v23
  %v38 = vsel %vm36, %v15, %v25
  %vm39 = vcmask 654336
  %v40 = vsel %vm39, %v37, %v31
  %v41 = vsel %vm39, %v38, %v33
  %v42 = vld [vmem:[%s1] sm:$0xff]
  %v43 = vld [vmem:[%s1 + $0x8] sm:$0xff]
  %v44 = vld [vmem:[%s1 + $0x10] sm:$0xff]
  %v45 = vld [vmem:[%s1 + $0x18] sm:$0xff]
  %v46 = vld [vmem:[%s1 + $0x20] sm:$0xff]
  %v47 = vld [vmem:[%s1 + $0x28] sm:$0xff]
  %v48 = vld [vmem:[%s1 + $0x30] sm:$0xff]
  %v49 = vld [vmem:[%s1 + $0x38] sm:$0xff]
  %v50 = vld [vmem:[%s1 + $0x40] sm:$0xff]
  %v51 = vld [vmem:[%s1 + $0x48] sm:$0xff]
  %v52 = vld [vmem:[%s1 + $0x50] sm:$0xff]
  %v53 = vld [vmem:[%s1 + $0x58] sm:$0xff]
  %v54 = vld [vmem:[%s1 + $0x60] sm:$0xff]
  %v55 = vld [vmem:[%s1 + $0x68] sm:$0xff]
  %v56 = vld [vmem:[%s1 + $0x70] sm:$0xff]
  %v57 = vld [vmem:[%s1 + $0x78] sm:$0xff]
  %v58 = vld [vmem:[%s1 + $0x80] sm:$0xff]
  %v59 = vld [vmem:[%s1 + $0x88] sm:$0xff]
  %v60 = vld [vmem:[%s1 + $0x90] sm:$0xff]
  %v61 = vld [vmem:[%s1 + $0x98] sm:$0xff]
  %v62 = vld [vmem:[%s1 + $0xa0] sm:$0xff]
  %v63 = vld [vmem:[%s1 + $0xa8] sm:$0xff]
  %v64 = vld [vmem:[%s1 + $0xb0] sm:$0xff]
  %v65 = vld [vmem:[%s1 + $0xb8] sm:$0xff]
  %v66 = vld [vmem:[%s1 + $0xc0] sm:$0xff]
  %v67 = vld [vmem:[%s1 + $0xc8] sm:$0xff]
  %v68 = vld [vmem:[%s1 + $0xd0] sm:$0xff]
  %v69 = vld [vmem:[%s1 + $0xd8] sm:$0xff]
  %v70 = vld [vmem:[%s1 + $0xe0] sm:$0xff]
  %v71 = vld [vmem:[%s1 + $0xe8] sm:$0xff]
  %v72 = vld [vmem:[%s2] sm:$0x3]
  %v74 = vlaneseq
  %v75 = vshrl.u32 %v74, 7
  %v76 = vsub.s32 0, %v75
  %v77 = vrot.slane %v72, %v76
  %v78 = vlaneseq
  %v79 = vshrl.u32 %v78, 7
  %v80 = vsub.s32 1, %v79
  %v81 = vrot.slane %v72, %v80
  %vm84 = vcmask 982016
  %v86 = vsel %vm84, %v40, 0
  %v89 = vsel %vm84, %v41, 0
  %91 = vmatprep.subr.mxu0 %v43
  %92 = vmatpush1.msra.mxu0 %v42
  %93 = vmatprep.subr.mxu0 %v45
  %94 = vmatpush1.msra.mxu0 %v44
  %95 = vmatprep.subr.mxu0 %v47
  %96 = vmatpush1.msra.mxu0 %v46
  %97 = vmatprep.subr.mxu0 %v49
  %98 = vmatpush1.msra.mxu0 %v48
  %99 = vmatprep.subr.mxu0 %v51
  %100 = vmatpush1.msra.mxu0 %v50
  %101 = vmatprep.subr.mxu0 %v53
  %102 = vmatpush1.msra.mxu0 %v52
  %103 = vmatprep.subr.mxu0 %v55
  %104 = vmatpush1.msra.mxu0 %v54
  %105 = vmatprep.subr.mxu0 %v57
  %106 = vmatpush1.msra.mxu0 %v56
  %107 = vmatprep.subr.mxu0 %v59
  %108 = vmatpush1.msra.mxu0 %v58
  %109 = vmatprep.subr.mxu0 %v61
  %110 = vmatpush1.msra.mxu0 %v60
  %111 = vmatprep.subr.mxu0 %v63
  %112 = vmatpush1.msra.mxu0 %v62
  %113 = vmatprep.subr.mxu0 %v65
  %114 = vmatpush1.msra.mxu0 %v64
  %115 = vmatprep.subr.mxu0 %v67
  %116 = vmatpush1.msra.mxu0 %v66
  %117 = vmatprep.subr.mxu0 %v69
  %118 = vmatpush1.msra.mxu0 %v68
  %119 = vmatprep.subr.mxu0 %v71
  %120 = vmatpush1.msra.mxu0 %v70
  %121 = vmatprep.subr.mxu0 0.0
  %122 = vmatpush1.msra.mxu0 0.0
  %123 = vmatprep.subr.mxu0 0.0
  %124 = vmatpush1.msra.mxu0 0.0
  %125 = vmatprep.subr.mxu0 0.0
  %126 = vmatpush1.msra.mxu0 0.0
  %127 = vmatprep.subr.mxu0 0.0
  %128 = vmatpush1.msra.mxu0 0.0
  %129 = vmatprep.subr.mxu0 0.0
  %130 = vmatpush1.msra.mxu0 0.0
  %131 = vmatprep.subr.mxu0 0.0
  %132 = vmatpush1.msra.mxu0 0.0
  %133 = vmatprep.subr.mxu0 0.0
  %134 = vmatpush1.msra.mxu0 0.0
  %135 = vmatprep.subr.mxu0 0.0
  %136 = vmatpush1.msra.mxu0 0.0
  %137 = vmatprep.subr.mxu0 0.0
  %138 = vmatpush1.msra.mxu0 0.0
  %139 = vmatprep.subr.mxu0 0.0
  %140 = vmatpush1.msra.mxu0 0.0
  %141 = vmatprep.subr.mxu0 0.0
  %142 = vmatpush1.msra.mxu0 0.0
  %143 = vmatprep.subr.mxu0 0.0
  %144 = vmatpush1.msra.mxu0 0.0
  %145 = vmatprep.subr.mxu0 0.0
  %146 = vmatpush1.msra.mxu0 0.0
  %147 = vmatprep.subr.mxu0 0.0
  %148 = vmatpush1.msra.mxu0 0.0
  %149 = vmatprep.subr.mxu0 0.0
  %150 = vmatpush1.msra.mxu0 0.0
  %151 = vmatprep.subr.mxu0 0.0
  %152 = vmatpush1.msra.mxu0 0.0
  %153 = vmatprep.subr.mxu0 0.0
  %154 = vmatpush1.msra.mxu0 0.0
  %155 = vmatprep.mubr.f32.mxu0 0.0
  %156 = vmatmul.mubr.f32.gmra.mrb[0].mxu0 %v86
  %v157 = vpop.f32.mrb[0].mxu0
  %v158 = vadd.f32 %v77, %v157
  %v159 = vpop.f32.mrb[0].mxu0
  %v160 = vadd.f32 %v81, %v159
  %161 = vmatprep.mubr.f32.mxu0 0.0
  %162 = vmatmul.mubr.f32.gmra.mrb[0].mxu0 %v89
  %v163 = vpop.f32.mrb[0].mxu0
  %v164 = vadd.f32 %v77, %v163
  %v165 = vpop.f32.mrb[0].mxu0
  %v166 = vadd.f32 %v81, %v165
  %167 = vdwg.mxu0
  %v168 = vmax.f32 %v158, 0.0
  %v169 = vmax.f32 %v160, 0.0
  %v170 = vmax.f32 %v164, 0.0
  %v171 = vmax.f32 %v166, 0.0
  %172 = vst [vmem:[%s3] sm:$0xff] %v168
  %173 = vst [vmem:[%s3 + $0x8] sm:$0xff] %v169
  %174 = vst [vmem:[%s3 + $0x10] sm:$0xff] %v170
  %175 = vst [vmem:[%s3 + $0x18] sm:$0xff] %v171
  // Predicated region
  $region14: #{convblock_forward.1} parent=0 // pred_check
    _
  $region15: #{convblock_forward.1} parent=0 // pred_check_branch
    %177 = sbr.rel (0) target = $region17
  $region16: #{convblock_forward.1} parent=0 // pred_region
    _
  $region17: #{convblock_forward.1} parent=0 // pred_fallthru
    _
  // Predicated region
  $region18: #{convblock_forward.1} parent=0 // pred_check
    _
  $region19: #{convblock_forward.1} parent=0 // pred_check_branch
    %179 = sbr.rel (0) target = $region21
  $region20: #{convblock_forward.1} parent=0 // pred_region
    _
  $region21: #{convblock_forward.1} parent=0 // pred_fallthru
    _

</llo_original>
